<compile_context>
chip_gen: v5e
topology: v5e:2x2
jax: 0.10.0
libtpu: 0.0.40
codegen_flags: <defaults>
</compile_context>

<pallas_src>
import functools
import math

import numpy as np
import jax
import jax.numpy as jnp
from jax.experimental import pallas as pl
from jax.experimental.pallas import tpu as pltpu


# ----------------------------------------------------------------------------
# Small helpers
# ----------------------------------------------------------------------------
def _round_up(v, m):
    return (v + m - 1) // m * m


def _kpad(cin_p):
    # Folded contraction dim: 9 taps * cin_p, zero-padded so every staging
    # store in the kernel lands on a 16-row (full bf16 tile) boundary.
    return 9 * cin_p + (-cin_p) % 16


def _pick_elems_per_step(n, max_per_step=4):
    """Largest divisor of n (<= max_per_step) that still leaves >= 2 grid steps."""
    best = 1
    for d in range(1, min(n, max_per_step) + 1):
        if n % d == 0 and n // d >= 2:
            best = d
    return best


def _roll_matches_numpy():
    """Probe pltpu.roll's shift direction once (run OUTSIDE jit)."""
    def k(x_ref, o_ref):
        o_ref[...] = pltpu.roll(x_ref[...], 1, axis=1)
    x = jnp.arange(8 * 128, dtype=jnp.float32).reshape(8, 128)
    y = np.asarray(pl.pallas_call(
        k, out_shape=jax.ShapeDtypeStruct((8, 128), jnp.float32))(x))
    xn = np.asarray(x)
    if np.array_equal(y, np.roll(xn, 1, axis=1)):
        return True
    if np.array_equal(y, np.roll(xn, -1, axis=1)):
        return False
    raise AssertionError("unexpected pltpu.roll semantics")


def _conv_tap_meta(W, L, roll_like_np=True):
    """Per-tap lane-roll amount + dx for a 3x3 'same' conv on the flat layout."""
    shifts, dxs = [], []
    for dy in (-1, 0, 1):
        for dx in (-1, 0, 1):
            off = dy * W + dx                       # want shifted[i] = src[i + off]
            shifts.append(((-off) if roll_like_np else off) % L)
            dxs.append(dx)
    return tuple(shifts), tuple(dxs)


def _build_masks(H, W, hwp, n_elems):
    """Rows: [valid, col!=0 (dx=+1), col!=W-1 (dx=-1), elem_0..elem_{n-1}]."""
    hw = H * W
    col = np.arange(hw) % W
    valid = np.zeros(hwp, np.float32); valid[:hw] = 1.0
    m_l = np.zeros(hwp, np.float32); m_l[:hw] = (col != 0)
    m_r = np.zeros(hwp, np.float32); m_r[:hw] = (col != W - 1)
    rows = [np.tile(valid, n_elems), np.tile(m_l, n_elems), np.tile(m_r, n_elems)]
    for e in range(n_elems):
        em = np.zeros(n_elems * hwp, np.float32)
        em[e * hwp:e * hwp + hw] = 1.0
        rows.append(em)
    return jnp.asarray(np.stack(rows, axis=0))


def _to_lane_batched(x3, nper):
    n, c, p = x3.shape
    return (x3.reshape(n // nper, nper, c, p)
            .transpose(0, 2, 1, 3).reshape(n // nper, c, nper * p))


def _from_lane_batched(y3, nper, hwp):
    s, c, _ = y3.shape
    return (y3.reshape(s, c, nper, hwp)
            .transpose(0, 2, 1, 3).reshape(s * nper, c, hwp))


# ----------------------------------------------------------------------------
# Fused BranchUnit kernel (one lane-batched group of elements per grid step)
# ----------------------------------------------------------------------------
def _branch_unit_kernel(*refs, n_blocks, has_tail, has_scale, res_scale, hw,
                        n_elems, shifts, dxs):
    """refs = [x, masks, (inv_scale?), *weights, out, x9_scratch].

      x         : (Cin_p, L)  f32, zero on pad lanes / pad channels
      masks     : (3 + n_elems, L) f32
      inv_scale : (Cin_p, 1)  f32 optional per-channel pre-scale (1/counter)
      conv w    : (Cout, Kpad) bf16 (tap-major fold, zero-padded K), b: (Cout,1) f32
      out       : (Cout, L)   f32
      x9_scratch: (Kmax, L)   bf16 VMEM staging for the folded conv operand
    """
    x_ref, masks_ref = refs[0], refs[1]
    pos = 2
    scale_ref = None
    if has_scale:
        scale_ref = refs[pos]
        pos += 1
    o_ref = refs[-2]
    x9_ref = refs[-1]
    wts = list(refs[pos:-2])

    vmask = masks_ref[pl.ds(0, 1), :]       # valid (non-pad) lanes, per element
    mask_l = masks_ref[pl.ds(1, 1), :]      # source col != 0     (dx = +1 taps)
    mask_r = masks_ref[pl.ds(2, 1), :]      # source col != W-1   (dx = -1 taps)

    def conv3x3(inp, w_ref, b_ref, relu):
        cin = inp.shape[0]
        kpad = w_ref.shape[1]
        x_l = inp * mask_l
        x_r = inp * mask_r

        def tap(k):
            dx = dxs[k]
            src = x_l if dx == 1 else (x_r if dx == -1 else inp)
            sh = shifts[k]
            return pltpu.roll(src, sh, axis=1) if sh else src

        # Stage the folded (Kpad, L) bf16 operand in VMEM, 16-row aligned stores.
        for p in range(4):
            chunk = jnp.concatenate([tap(2 * p), tap(2 * p + 1)], axis=0)
            x9_ref[pl.ds(2 * cin * p, 2 * cin), :] = chunk.astype(jnp.bfloat16)
        last = tap(8)
        padr = kpad - 9 * cin
        if padr:
            last = jnp.concatenate(
                [last, jnp.zeros((padr,) + last.shape[1:], last.dtype)], axis=0)
        x9_ref[pl.ds(8 * cin, cin + padr), :] = last.astype(jnp.bfloat16)

        # One MXU matmul per conv: (Cout, K) @ (K, L), f32 accumulation.
        acc = jnp.dot(w_ref[...], x9_ref[pl.ds(0, kpad), :],
                      preferred_element_type=jnp.float32)
        acc = acc + b_ref[...]
        if relu:
            acc = jnp.maximum(acc, 0.0)
        return acc * vmask                  # re-zero pad lanes

    def rcab(xin, c1w, c1b, c2w, c2b, w1t, b1, w2, b2):
        h = conv3x3(xin, c1w, c1b, relu=True)
        body = conv3x3(h, c2w, c2b, relu=False)
        # Channel attention (squeeze-excite), per lane-batched element, all f32.
        scale = None
        for e in range(n_elems):
            em = masks_ref[pl.ds(3 + e, 1), :]
            pooled = jnp.sum(body * em, axis=1, keepdims=True) * (1.0 / hw)  # (F,1)
            z = jnp.maximum(
                jnp.sum(w1t[...] * pooled, axis=0, keepdims=True) + b1[...], 0.0)
            t = jnp.sum(w2[...] * z, axis=1, keepdims=True) + b2[...]
            s = 1.0 / (1.0 + jnp.exp(-t))                                    # (F,1)
            contrib = s * em
            scale = contrib if scale is None else scale + contrib
        return xin + res_scale * body * scale

    x = x_ref[...].astype(jnp.float32)
    if scale_ref is not None:
        x = x * scale_ref[...]              # fused per-channel 1/counter scaling

    y = conv3x3(x, wts[0], wts[1], relu=False)          # head
    wi = 2
    for _ in range(n_blocks):
        y = rcab(y, *wts[wi:wi + 8])
        wi += 8
    if has_tail:
        y = conv3x3(y, wts[wi], wts[wi + 1], relu=False)
    o_ref[...] = y.astype(o_ref.dtype)


def _const_spec(arr):
    zeros = (0,) * arr.ndim
    return pl.BlockSpec(arr.shape, lambda n: zeros)


def branch_unit_apply(x3, weights, masks, *, n_blocks, has_tail, out_channels,
                      res_scale, hw, n_elems, shifts, dxs, k_rows,
                      inv_scale=None):
    """x3: (N, Cin_p, L) -> (N, out_channels, L); one grid step per row of N."""
    N, Cin, L = x3.shape
    inputs = [x3, masks]
    in_specs = [
        pl.BlockSpec((pl.Squeezed(), Cin, L), lambda n: (n, 0, 0)),
        _const_spec(masks),
    ]
    if inv_scale is not None:
        inputs.append(inv_scale)
        in_specs.append(_const_spec(inv_scale))
    inputs += list(weights)
    in_specs += [_const_spec(a) for a in weights]

    kernel = functools.partial(
        _branch_unit_kernel, n_blocks=n_blocks, has_tail=has_tail,
        has_scale=inv_scale is not None, res_scale=float(res_scale),
        hw=float(hw), n_elems=n_elems, shifts=tuple(shifts), dxs=tuple(dxs))

    return pl.pallas_call(
        kernel,
        out_shape=jax.ShapeDtypeStruct((N, out_channels, L), jnp.float32),
        grid=(N,),
        in_specs=in_specs,
        out_specs=pl.BlockSpec((pl.Squeezed(), out_channels, L),
                               lambda n: (n, 0, 0)),
        scratch_shapes=[pltpu.VMEM((k_rows, L), jnp.bfloat16)],
        compiler_params=pltpu.CompilerParams(
            dimension_semantics=("parallel",)),
    )(*inputs)


# ----------------------------------------------------------------------------
# Parameter construction (deterministic synthetic weights, kernel layouts)
# ----------------------------------------------------------------------------
def _conv_params(key, cin, cout, scale=0.1):
    cin_p = _round_up(cin, 8)
    kpad = _kpad(cin_p)
    kw, kb = jax.random.split(key)
    w = jax.random.normal(kw, (cout, cin, 3, 3), jnp.float32) * scale
    wfull = jnp.zeros((cout, cin_p, 3, 3), jnp.float32).at[:, :cin].set(w)
    # tap-major fold: column = ((dy+1)*3 + (dx+1)) * cin_p + c, then K zero-pad.
    wflat = jnp.transpose(wfull, (0, 2, 3, 1)).reshape(cout, 9 * cin_p)
    wflat = jnp.pad(wflat, ((0, 0), (0, kpad - 9 * cin_p))).astype(jnp.bfloat16)
    b = jax.random.normal(kb, (cout, 1), jnp.float32) * scale
    return {"w": wflat, "b": b, "w_oihw": w, "cin": cin, "cin_p": cin_p,
            "kpad": kpad}


def _rcab_params(key, f, reduction):
    k1, k2, k3, k4 = jax.random.split(key, 4)
    fr = max(f // reduction, 1)
    return {
        "c1": _conv_params(k1, f, f),
        "c2": _conv_params(k2, f, f),
        "ca_w1t": jax.random.normal(k3, (f, fr), jnp.float32) * 0.1,   # W1^T
        "ca_b1": jnp.zeros((1, fr), jnp.float32),
        "ca_w2": jax.random.normal(k4, (f, fr), jnp.float32) * 0.1,    # W2
        "ca_b2": jnp.zeros((f, 1), jnp.float32),
    }


def _branch_params(key, cin, n_feats, n_blocks, reduction, use_tail):
    keys = jax.random.split(key, n_blocks + 2)
    p = {"head": _conv_params(keys[0], cin, n_feats),
         "blocks": [_rcab_params(keys[1 + i], n_feats, reduction)
                    for i in range(n_blocks)]}
    if use_tail:
        p["tail"] = _conv_params(keys[-1], n_feats, cin)
    return p


def make_sspsr_params(key, n_subs, n_colors, n_blocks, n_feats, reduction=4):
    k1, k2, k3 = jax.random.split(key, 3)
    return {
        "branch": _branch_params(k1, n_subs, n_feats, n_blocks, reduction, True),
        "trunk": _branch_params(k2, n_colors, n_feats, n_blocks, reduction, False),
        "final": _conv_params(k3, n_feats, n_colors),
    }


def _weight_list(p, extra_tail=None):
    ws = [p["head"]["w"], p["head"]["b"]]
    for blk in p["blocks"]:
        ws += [blk["c1"]["w"], blk["c1"]["b"], blk["c2"]["w"], blk["c2"]["b"],
               blk["ca_w1t"], blk["ca_b1"], blk["ca_w2"], blk["ca_b2"]]
    if "tail" in p:
        ws += [p["tail"]["w"], p["tail"]["b"]]
    elif extra_tail is not None:
        ws += [extra_tail["w"], extra_tail["b"]]
    return ws


def _max_kpad(p, extra_tail=None):
    ks = [p["head"]["kpad"]]
    for blk in p["blocks"]:
        ks += [blk["c1"]["kpad"], blk["c2"]["kpad"]]
    if "tail" in p:
        ks.append(p["tail"]["kpad"])
    if extra_tail is not None:
        ks.append(extra_tail["kpad"])
    return max(ks)


# ----------------------------------------------------------------------------
# Forward pass (Pallas)
# ----------------------------------------------------------------------------
def sspsr_forward(params, x_nchw, start_idx, end_idx, res_scale,
                  roll_like_np=True):
    B, C, H, W = x_nchw.shape
    assert H == 33 and W == 33, "reference forward hardcodes a 33x33 canvas"
    hw = H * W
    hwp = _round_up(hw, 128)
    assert hwp - hw >= W + 1, "lane padding must exceed the largest conv roll"

    x = x_nchw.astype(jnp.float32).reshape(B, C, hw)
    x = jnp.pad(x, ((0, 0), (0, 0), (0, hwp - hw)))

    n_subs = end_idx[0] - start_idx[0]
    G = len(start_idx)
    n_blocks = len(params["branch"]["blocks"])
    n_feats = params["branch"]["head"]["w"].shape[0]
    assert n_feats % 8 == 0, "kernel staging assumes n_feats multiple of 8"

    # ---- shared branch over the G overlapping spectral groups ------------
    xg = jnp.stack([x[:, s:e, :] for s, e in zip(start_idx, end_idx)], axis=0)
    xg = xg.reshape(G * B, n_subs, hwp)
    cin_p = params["branch"]["head"]["cin_p"]
    if cin_p > n_subs:                       # zero-pad head input channels to 8k
        xg = jnp.pad(xg, ((0, 0), (0, cin_p - n_subs), (0, 0)))

    nper_b = _pick_elems_per_step(G * B)
    xg_b = _to_lane_batched(xg, nper_b)
    shifts_b, dxs = _conv_tap_meta(W, nper_b * hwp, roll_like_np)
    masks_b = _build_masks(H, W, hwp, nper_b)
    bout = branch_unit_apply(
        xg_b, _weight_list(params["branch"]), masks_b,
        n_blocks=n_blocks, has_tail=True, out_channels=n_subs,
        res_scale=res_scale, hw=hw, n_elems=nper_b, shifts=shifts_b, dxs=dxs,
        k_rows=_max_kpad(params["branch"]))
    bout = _from_lane_batched(bout, nper_b, hwp).reshape(G, B, n_subs, hwp)

    # ---- overlap-add; per-channel 1/counter fused into the trunk ----------
    y = jnp.zeros((B, C, hwp), jnp.float32)
    counter = np.zeros((C,), np.float32)
    for g, (s, e) in enumerate(zip(start_idx, end_idx)):
        y = y.at[:, s:e, :].add(bout[g])
        counter[s:e] += 1.0
    assert (counter > 0).all(), "some channel never covered by a spectral group"
    inv = jnp.asarray((1.0 / counter).astype(np.float32).reshape(C, 1))

    # ---- trunk (no tail) with the `final` conv fused in as its tail -------
    cin_pt = params["trunk"]["head"]["cin_p"]
    y_in, inv_in = y, inv
    if cin_pt > C:
        y_in = jnp.pad(y, ((0, 0), (0, cin_pt - C), (0, 0)))
        inv_in = jnp.pad(inv, ((0, cin_pt - C), (0, 0)), constant_values=1.0)
    nper_t = _pick_elems_per_step(B)
    y_b = _to_lane_batched(y_in, nper_t)
    shifts_t, _ = _conv_tap_meta(W, nper_t * hwp, roll_like_np)
    masks_t = _build_masks(H, W, hwp, nper_t)
    tout = branch_unit_apply(
        y_b, _weight_list(params["trunk"], extra_tail=params["final"]), masks_t,
        n_blocks=len(params["trunk"]["blocks"]), has_tail=True, out_channels=C,
        res_scale=res_scale, hw=hw, n_elems=nper_t, shifts=shifts_t, dxs=dxs,
        k_rows=_max_kpad(params["trunk"], extra_tail=params["final"]),
        inv_scale=inv_in)
    tout = _from_lane_batched(tout, nper_t, hwp)

    return tout[:, :, :hw].reshape(B, C, H, W)


# ----------------------------------------------------------------------------
# Pure-JAX reference (lax.conv) mirroring the PyTorch forward, for validation
# ----------------------------------------------------------------------------
def _ref_conv(x, p):
    w = p["w_oihw"].astype(jnp.bfloat16)
    y = jax.lax.conv_general_dilated(
        x.astype(jnp.bfloat16), w, window_strides=(1, 1), padding="SAME",
        dimension_numbers=("NCHW", "OIHW", "NCHW"),
        preferred_element_type=jnp.float32)
    return y + p["b"][:, 0][None, :, None, None]


def _ref_rcab(x, blk, res_scale):
    h = jnp.maximum(_ref_conv(x, blk["c1"]), 0.0)
    body = _ref_conv(h, blk["c2"])
    pooled = jnp.mean(body, axis=(2, 3))                                  # (N,F)
    z = jnp.maximum(jnp.dot(pooled, blk["ca_w1t"],
                            precision=jax.lax.Precision.HIGHEST) + blk["ca_b1"], 0.0)
    t = jnp.dot(z, blk["ca_w2"].T,
                precision=jax.lax.Precision.HIGHEST) + blk["ca_b2"][:, 0][None, :]
    s = 1.0 / (1.0 + jnp.exp(-t))
    return x + res_scale * body * s[:, :, None, None]


def _ref_branch(x, p, res_scale):
    y = _ref_conv(x, p["head"])
    for blk in p["blocks"]:
        y = _ref_rcab(y, blk, res_scale)
    if "tail" in p:
        y = _ref_conv(y, p["tail"])
    return y


def sspsr_reference(params, x, start_idx, end_idx, res_scale):
    B, C, H, W = x.shape
    y = jnp.zeros((B, C, 33, 33), jnp.float32)
    counter = np.zeros((C,), np.float32)
    for s, e in zip(start_idx, end_idx):
        y = y.at[:, s:e].add(_ref_branch(x[:, s:e], params["branch"], res_scale))
        counter[s:e] += 1.0
    inv = (1.0 / counter).astype(np.float32)
    y = y * jnp.asarray(inv)[None, :, None, None]
    y = _ref_branch(y, params["trunk"], res_scale)
    y = _ref_conv(y, params["final"])
    return y


# ----------------------------------------------------------------------------
# Main
# ----------------------------------------------------------------------------
if __name__ == "__main__":
    n_subs, n_ovls, n_colors = 4, 1, 8
    n_blocks, n_feats, res_scale = 2, 8, 0.1
    B, H, W = 2, 33, 33

    # Group index bookkeeping (exactly as in SSPSR.__init__).
    G = math.ceil((n_colors - n_ovls) / (n_subs - n_ovls))
    start_idx, end_idx = [], []
    for g in range(G):
        sta = (n_subs - n_ovls) * g
        end = sta + n_subs
        if end > n_colors:
            end = n_colors
            sta = n_colors - n_subs
        start_idx.append(sta)
        end_idx.append(end)

    key = jax.random.PRNGKey(0)
    kp, kx = jax.random.split(key)
    params = make_sspsr_params(kp, n_subs, n_colors, n_blocks, n_feats)
    x = jax.random.normal(kx, (B, n_colors, H, W), jnp.float32)

    roll_like_np = _roll_matches_numpy()     # probed outside jit

    fwd = jax.jit(functools.partial(
        sspsr_forward, params,
        start_idx=tuple(start_idx), end_idx=tuple(end_idx),
        res_scale=res_scale, roll_like_np=roll_like_np))
    out = fwd(x)
    jax.block_until_ready(out)
    assert out.shape == (B, n_colors, H, W)
    assert bool(jnp.all(jnp.isfinite(out)))

    # Cross-check against a pure-JAX (lax.conv) reference of the same math.
    ref = jax.jit(functools.partial(
        sspsr_reference, params,
        start_idx=tuple(start_idx), end_idx=tuple(end_idx),
        res_scale=res_scale))(x)
    np.testing.assert_allclose(np.asarray(out), np.asarray(ref),
                               rtol=2e-2, atol=2e-2)

    print("KERNEL_OK")
</pallas_src>

<mosaic_0001>
module attributes {stable_mosaic.version = 11 : i64} {
  func.func @k(%arg0: memref<8x128xf32, #tpu.memory_space<vmem>>, %arg1: memref<8x128xf32, #tpu.memory_space<vmem>>) attributes {dimension_semantics = [], scalar_prefetch = 0 : i64, scratch_operands = 0 : i64, tpu.core_type = #tpu.core_type<tc>} {
    %c0 = arith.constant 0 : index
    %c0_0 = arith.constant 0 : index
    %0 = vector.load %arg0[%c0, %c0_0] : memref<8x128xf32, #tpu.memory_space<vmem>>, vector<8x128xf32>
    %c1_i32 = arith.constant 1 : i32
    %1 = tpu.dynamic_rotate %0 by %c1_i32 dim 1 : vector<8x128xf32>, i32 -> vector<8x128xf32>
    %c0_1 = arith.constant 0 : index
    %c0_2 = arith.constant 0 : index
    %2 = vector.load %arg1[%c0_1, %c0_2] : memref<8x128xf32, #tpu.memory_space<vmem>>, vector<8x128xf32>
    tpu.vector_store %arg1[%c0_1, %c0_2], %1 {strides = array<i32>} : memref<8x128xf32, #tpu.memory_space<vmem>>, vector<8x128xf32>,
    return
  }
}

</mosaic_0001>

<llo_original>
// kernel: tpu_custom_call.1
$region0: #{tpu_custom_call.1}
  #allocation0 [shape = 'u32[]', space=smem, size = 0x4, offset = 0x4, fixed_abs, tag = 'smem constant byte address 0x4 - core index']
  #allocation1 [shape = 'u32[72,128]{1,0:T(1,128)}', space=vmem, size = 0x9000, scoped, tag = 'internal scratch']
  %s0 = inlined_call_operand.hbm [shape: f32[8,128], index: 0, kind: input, shape index: {}]
  %s1 = inlined_call_operand.hbm [shape: f32[8,128], index: 1, kind: output, shape index: {}]
  %s2 = sld [smem:[#allocation0]]
  $region18: #{tpu_custom_call.1} parent=0
    _
  %s4 = ssub.s32 1, %s2
  %s5 = scalar_select 0, %s4, %s2
  $region1: #{tpu_custom_call.1} parent=0
    #allocation2 [shape = 'u8[4096]{0}', space=vmem, size = 0x1000, scoped, tag = 'input window, operand 0, single buffered']
    #allocation3 [shape = 's32[1]{0}', space=sflag, size = 0x4, scoped, tag = 'scoped memory for tpu_custom_call.1']
    #allocation4 [shape = 's32[1]{0}', space=sflag, size = 0x4, scoped, tag = 'scoped memory for tpu_custom_call.1']
    #allocation5 [shape = 'u8[4096]{0}', space=vmem, size = 0x1000, scoped, tag = 'output window, operand 0, single buffered']
    %6 = vsyncpa [#allocation3], 0
    %7 = vsyncpa [#allocation4], 0
    // Predicated region
    $region2: #{tpu_custom_call.1} parent=1 // pred_check
      _
    $region3: #{tpu_custom_call.1} parent=1 // pred_check_branch
      %9 = sbr.rel (0) target = $region5
    $region4: #{tpu_custom_call.1} parent=1 // pred_region
      %11 = vsyncadd [#allocation3], 0
      %s13 = sshll.u32 %s0, 4
      %s14 = int_to_ptr.hbm [resolvable:$true] %s13
      %s15 = sshll.u32 [#allocation2], 4
      %s16 = int_to_ptr.vmem [resolvable:$true] %s15
      %18 = dma.hbm_to_vmem [thread:$0]  %s14, 128, %s16, [#allocation3]
    $region5: #{tpu_custom_call.1} parent=1 // pred_fallthru
      _
    // Predicated region
    $region6: #{tpu_custom_call.1} parent=1 // pred_check
      _
    $region7: #{tpu_custom_call.1} parent=1 // pred_check_branch
      %20 = sbr.rel (0) target = $region9
    $region8: #{tpu_custom_call.1} parent=1 // pred_region
      %22 = dma.done [#allocation3], 128
    $region9: #{tpu_custom_call.1} parent=1 // pred_fallthru
      _
    %v23 = vld [vmem:[#allocation2] sm:$0xff]
    %24 = vrot.lane.b32.xlu0 %v23, 1
    %v25 = vpop.permute.xlu0 %24
    %26 = vst [vmem:[#allocation5] sm:$0xff] %v25
    // Predicated region
    $region10: #{tpu_custom_call.1} parent=1 // pred_check
      _
    $region11: #{tpu_custom_call.1} parent=1 // pred_check_branch
      %28 = sbr.rel (0) target = $region13
    $region12: #{tpu_custom_call.1} parent=1 // pred_region
      %30 = vsyncadd [#allocation4], 0
      %s32 = sshll.u32 [#allocation5], 4
      %s33 = int_to_ptr.vmem [resolvable:$true] %s32
      %s34 = sshll.u32 %s1, 4
      %s35 = int_to_ptr.hbm [resolvable:$true] %s34
      %37 = dma.vmem_to_hbm [thread:$0]  %s33, 128, %s35, [#allocation4]
    $region13: #{tpu_custom_call.1} parent=1 // pred_fallthru
      _
    // Predicated region
    $region14: #{tpu_custom_call.1} parent=1 // pred_check
      _
    $region15: #{tpu_custom_call.1} parent=1 // pred_check_branch
      %39 = sbr.rel (0) target = $region17
    $region16: #{tpu_custom_call.1} parent=1 // pred_region
      %41 = dma.done [#allocation4], 128
    $region17: #{tpu_custom_call.1} parent=1 // pred_fallthru
      _
    %42 = vsyncpa [#allocation3], 1
    %43 = vsyncpa [#allocation4], 1

</llo_original>
